<compile_context>
chip_gen: v5e
topology: v5e:2x2
jax: 0.10.0
libtpu: 0.0.40
codegen_flags: <defaults>
</compile_context>

<pallas_src>
import jax
import jax.numpy as jnp
from jax.experimental import pallas as pl
from jax.experimental.pallas import tpu as pltpu


def _mish_kernel(x_ref, o_ref):
    # Upcast to f32 for the transcendental math (exact for f32 inputs,
    # improves bf16 accuracy), downcast on store.
    x = x_ref[...].astype(jnp.float32)
    n = jnp.exp(-jnp.abs(x))                  # single EUP transcendental, n in (0, 1]
    n_np2 = n * (n + 2.0)                     # n(n+2)
    pos = x >= 0.0
    num = jnp.where(pos, 1.0 + 2.0 * n, n_np2)
    den = jnp.where(pos, 1.0 + 2.0 * n + 2.0 * n * n, n_np2 + 2.0)
    # den >= 1 everywhere, so the reciprocal is always well defined.
    inv_den = pl.reciprocal(den, approx=False)
    o_ref[...] = (x * num * inv_den).astype(o_ref.dtype)


def mish(x: jax.Array, *, target_block_bytes: int = 2 * 1024 * 1024) -> jax.Array:
    orig_shape = x.shape
    orig_dtype = x.dtype

    flat = x.reshape(-1)
    n = flat.shape[0]

    # Pick the widest lane-dense last dim that divides the element count so the
    # common (NCHW, power-of-two-ish sizes) path needs no padding at all.
    lanes = None
    for cand in (1024, 512, 256, 128):
        if n % cand == 0:
            lanes = cand
            break
    pad = 0
    if lanes is None:
        # Rare ragged case: pad to a multiple of 128 lanes, slice afterwards.
        lanes = 128
        padded = pl.cdiv(n, lanes) * lanes
        pad = padded - n
        flat = jnp.pad(flat, (0, pad))

    rows = flat.shape[0] // lanes
    x2d = flat.reshape(rows, lanes)

    itemsize = jnp.dtype(orig_dtype).itemsize
    # ~2 MiB blocks; round the row count to a multiple of 32 sublanes so the
    # block shape satisfies (8,128)/bf16(16)/int8(32) packing constraints.
    bt = max(32, (target_block_bytes // (lanes * itemsize)) // 32 * 32)

    if rows <= bt:
        # Single block equal to the full array — always legal, no divisibility
        # requirements, no padding.
        block_rows = rows
        grid = (1,)
    else:
        block_rows = bt
        grid = (pl.cdiv(rows, bt),)  # Pallas masks the ragged last tile.

    out2d = pl.pallas_call(
        _mish_kernel,
        out_shape=jax.ShapeDtypeStruct((rows, lanes), orig_dtype),
        grid_spec=pltpu.PrefetchScalarGridSpec(
            num_scalar_prefetch=0,
            grid=grid,
            in_specs=[pl.BlockSpec((block_rows, lanes), lambda i: (i, 0))],
            out_specs=pl.BlockSpec((block_rows, lanes), lambda i: (i, 0)),
        ),
        compiler_params=pltpu.CompilerParams(
            dimension_semantics=("parallel",),
        ),
    )(x2d)

    out_flat = out2d.reshape(-1)
    if pad:
        out_flat = out_flat[:n]
    return out_flat.reshape(orig_shape)


if __name__ == "__main__":
    key = jax.random.PRNGKey(0)
    x = jax.random.normal(key, (2, 4, 16, 16), dtype=jnp.float32)

    y = mish(x)
    jax.block_until_ready(y)

    # Correctness check against a pure-JAX reference.
    ref = x * jnp.tanh(jax.nn.softplus(x))
    assert y.shape == x.shape and y.dtype == x.dtype
    assert jnp.max(jnp.abs(y - ref)) < 1e-5

    print("KERNEL_OK")
</pallas_src>

<mosaic_0001>
module attributes {stable_mosaic.version = 11 : i64} {
  func.func @_mish_kernel(%arg0: i32, %arg1: memref<2x1024xf32, #tpu.memory_space<vmem>>, %arg2: memref<2x1024xf32, #tpu.memory_space<vmem>>) attributes {dimension_semantics = [#tpu.dimension_semantics<parallel>], iteration_bounds = array<i64: 1>, scalar_prefetch = 0 : i64, scratch_operands = 0 : i64, tpu.core_type = #tpu.core_type<tc>, window_params = [{transform_indices = @transform_0, window_bounds = array<i64: 2, 1024>}, {transform_indices = @transform_1, window_bounds = array<i64: 2, 1024>}]} {
    %c0 = arith.constant 0 : index
    %c0_0 = arith.constant 0 : index
    %0 = vector.load %arg1[%c0, %c0_0] : memref<2x1024xf32, #tpu.memory_space<vmem>>, vector<2x1024xf32>
    %1 = math.absf %0 : vector<2x1024xf32>
    %cst = arith.constant 0.000000e+00 : f32
    %2 = vector.broadcast %cst : f32 to vector<2x1024xf32>
    %3 = arith.subf %2, %1 : vector<2x1024xf32>
    %4 = math.exp %3 : vector<2x1024xf32>
    %cst_1 = arith.constant 2.000000e+00 : f32
    %5 = vector.broadcast %cst_1 : f32 to vector<2x1024xf32>
    %6 = arith.addf %4, %5 : vector<2x1024xf32>
    %7 = arith.mulf %4, %6 : vector<2x1024xf32>
    %cst_2 = arith.constant 0.000000e+00 : f32
    %8 = vector.broadcast %cst_2 : f32 to vector<2x1024xf32>
    %9 = arith.cmpf oge, %0, %8 : vector<2x1024xf32>
    %cst_3 = arith.constant 2.000000e+00 : f32
    %10 = vector.broadcast %cst_3 : f32 to vector<2x1024xf32>
    %11 = arith.mulf %10, %4 : vector<2x1024xf32>
    %cst_4 = arith.constant 1.000000e+00 : f32
    %12 = vector.broadcast %cst_4 : f32 to vector<2x1024xf32>
    %13 = arith.addf %12, %11 : vector<2x1024xf32>
    %14 = arith.select %9, %13, %7 : vector<2x1024xi1>, vector<2x1024xf32>
    %cst_5 = arith.constant 2.000000e+00 : f32
    %15 = vector.broadcast %cst_5 : f32 to vector<2x1024xf32>
    %16 = arith.mulf %15, %4 : vector<2x1024xf32>
    %cst_6 = arith.constant 1.000000e+00 : f32
    %17 = vector.broadcast %cst_6 : f32 to vector<2x1024xf32>
    %18 = arith.addf %17, %16 : vector<2x1024xf32>
    %cst_7 = arith.constant 2.000000e+00 : f32
    %19 = vector.broadcast %cst_7 : f32 to vector<2x1024xf32>
    %20 = arith.mulf %19, %4 : vector<2x1024xf32>
    %21 = arith.mulf %20, %4 : vector<2x1024xf32>
    %22 = arith.addf %18, %21 : vector<2x1024xf32>
    %cst_8 = arith.constant 2.000000e+00 : f32
    %23 = vector.broadcast %cst_8 : f32 to vector<2x1024xf32>
    %24 = arith.addf %7, %23 : vector<2x1024xf32>
    %25 = arith.select %9, %22, %24 : vector<2x1024xi1>, vector<2x1024xf32>
    %26 = tpu.reciprocal %25 : vector<2x1024xf32> -> vector<2x1024xf32>
    %27 = arith.mulf %0, %14 : vector<2x1024xf32>
    %28 = arith.mulf %27, %26 : vector<2x1024xf32>
    %c0_9 = arith.constant 0 : index
    %c0_10 = arith.constant 0 : index
    %29 = vector.load %arg2[%c0_9, %c0_10] : memref<2x1024xf32, #tpu.memory_space<vmem>>, vector<2x1024xf32>
    tpu.vector_store %arg2[%c0_9, %c0_10], %28 {strides = array<i32>} : memref<2x1024xf32, #tpu.memory_space<vmem>>, vector<2x1024xf32>,
    return
  }
  func.func @transform_0(%arg0: i32) -> (i32, i32) {
    %c0_i32 = arith.constant 0 : i32
    %c0_i32_0 = arith.constant 0 : i32
    return %arg0, %c0_i32 : i32, i32
  }
  func.func @transform_1(%arg0: i32) -> (i32, i32) {
    %c0_i32 = arith.constant 0 : i32
    %c0_i32_0 = arith.constant 0 : i32
    return %arg0, %c0_i32 : i32, i32
  }
}

</mosaic_0001>

<llo_original>
// kernel: tpu_custom_call.1
$region0: #{tpu_custom_call.1}
  #allocation0 [shape = 'u32[]', space=smem, size = 0x4, offset = 0x4, fixed_abs, tag = 'smem constant byte address 0x4 - core index']
  #allocation1 [shape = 'u32[72,128]{1,0:T(1,128)}', space=vmem, size = 0x9000, scoped, tag = 'internal scratch']
  %s0 = inlined_call_operand.hbm [shape: f32[2,1024], index: 0, kind: input, shape index: {}]
  %s1 = inlined_call_operand.hbm [shape: f32[2,1024], index: 1, kind: output, shape index: {}]
  %s2 = sld [smem:[#allocation0]]
  $region18: #{tpu_custom_call.1} parent=0
    _
  %s4 = ssub.s32 1, %s2
  %s5 = scalar_select 0, %s4, %s2
  $region1: #{tpu_custom_call.1} parent=0
    #allocation2 [shape = 'u8[8192]{0}', space=vmem, size = 0x2000, scoped, tag = 'input window, operand 0, single buffered']
    #allocation3 [shape = 's32[1]{0}', space=sflag, size = 0x4, scoped, tag = 'scoped memory for tpu_custom_call.1']
    #allocation4 [shape = 's32[1]{0}', space=sflag, size = 0x4, scoped, tag = 'scoped memory for tpu_custom_call.1']
    #allocation5 [shape = 'u8[8192]{0}', space=vmem, size = 0x2000, scoped, tag = 'output window, operand 0, single buffered']
    %6 = vsyncpa [#allocation3], 0
    %7 = vsyncpa [#allocation4], 0
    // Predicated region
    $region2: #{tpu_custom_call.1} parent=1 // pred_check
      _
    $region3: #{tpu_custom_call.1} parent=1 // pred_check_branch
      %9 = sbr.rel (0) target = $region5
    $region4: #{tpu_custom_call.1} parent=1 // pred_region
      %11 = vsyncadd [#allocation3], 0
      %s13 = sshll.u32 %s0, 4
      %s14 = int_to_ptr.hbm [resolvable:$true] %s13
      %s15 = sshll.u32 [#allocation2], 4
      %s16 = int_to_ptr.vmem [resolvable:$true] %s15
      %18 = dma.hbm_to_vmem [thread:$0]  %s14, 256, %s16, [#allocation3]
    $region5: #{tpu_custom_call.1} parent=1 // pred_fallthru
      _
    // Predicated region
    $region6: #{tpu_custom_call.1} parent=1 // pred_check
      _
    $region7: #{tpu_custom_call.1} parent=1 // pred_check_branch
      %20 = sbr.rel (0) target = $region9
    $region8: #{tpu_custom_call.1} parent=1 // pred_region
      %22 = dma.done [#allocation3], 256
    $region9: #{tpu_custom_call.1} parent=1 // pred_fallthru
      _
    %v23 = vld [vmem:[#allocation2] sm:$0xff]
    %v24 = vld [vmem:[#allocation2 + $0x8] sm:$0xff]
    %v25 = vand.u32 2147483647, %v23
    %v26 = vand.u32 2147483647, %v24
    %v27 = vsub.f32 0.0, %v25
    %v28 = vsub.f32 0.0, %v26
    %v29 = vmul.f32 %v27, 1.442695
    %v30 = vpow.pop %v29
    %v31 = vmul.f32 %v28, 1.442695
    %v32 = vpow.pop %v31
    %v33 = vadd.f32 %v30, 2.0
    %v34 = vadd.f32 %v32, 2.0
    %v35 = vmul.f32 %v30, %v33
    %v36 = vmul.f32 %v32, %v34
    %vm37 = vcmp.ge.f32.partialorder %v23, 0.0
    %vm38 = vcmp.ge.f32.partialorder %v24, 0.0
    %v39 = vmul.f32 %v30, 2.0
    %v40 = vmul.f32 %v32, 2.0
    %v41 = vadd.f32 %v39, 1.0
    %v42 = vadd.f32 %v40, 1.0
    %v43 = vsel %vm37, %v41, %v35
    %v44 = vsel %vm38, %v42, %v36
    %v45 = vmul.f32 %v39, %v30
    %v46 = vmul.f32 %v40, %v32
    %v47 = vadd.f32 %v41, %v45
    %v48 = vadd.f32 %v42, %v46
    %v49 = vadd.f32 %v35, 2.0
    %v50 = vadd.f32 %v36, 2.0
    %v51 = vsel %vm37, %v47, %v49
    %v52 = vsel %vm38, %v48, %v50
    %v53 = vrcp.pop %v51
    %v54 = vmul.f32 %v51, %v53
    %v55 = vsub.f32 1.0, %v54
    %v56 = vmul.f32 %v53, %v55
    %v57 = vadd.f32 %v53, %v56
    %vm58 = vweird.f32 %v51
    %vm59 = vweird.f32 %v53
    %vm60 = vmor %vm58, %vm59
    %v61 = vsel %vm60, %v53, %v57
    %v62 = vand.u32 2147483647, %v51
    %vm63 = vcmp.eq.f32.partialorder %v62, 8.507059e+37
    %v64 = vand.u32 %v51, 2147483648
    %v65 = vor.u32 1.1754944e-38, %v64
    %v66 = vsel %vm63, %v65, %v61
    %v67 = vrcp.pop %v52
    %v68 = vmul.f32 %v52, %v67
    %v69 = vsub.f32 1.0, %v68
    %v70 = vmul.f32 %v67, %v69
    %v71 = vadd.f32 %v67, %v70
    %vm72 = vweird.f32 %v52
    %vm73 = vweird.f32 %v67
    %vm74 = vmor %vm72, %vm73
    %v75 = vsel %vm74, %v67, %v71
    %v76 = vand.u32 2147483647, %v52
    %vm77 = vcmp.eq.f32.partialorder %v76, 8.507059e+37
    %v78 = vand.u32 %v52, 2147483648
    %v79 = vor.u32 1.1754944e-38, %v78
    %v80 = vsel %vm77, %v79, %v75
    %v81 = vmul.f32 %v23, %v43
    %v82 = vmul.f32 %v24, %v44
    %v83 = vmul.f32 %v81, %v66
    %v84 = vmul.f32 %v82, %v80
    %85 = vst [vmem:[#allocation5] sm:$0xff] %v83
    %86 = vst [vmem:[#allocation5 + $0x8] sm:$0xff] %v84
    // Predicated region
    $region10: #{tpu_custom_call.1} parent=1 // pred_check
      _
    $region11: #{tpu_custom_call.1} parent=1 // pred_check_branch
      %88 = sbr.rel (0) target = $region13
    $region12: #{tpu_custom_call.1} parent=1 // pred_region
      %90 = vsyncadd [#allocation4], 0
      %s92 = sshll.u32 [#allocation5], 4
      %s93 = int_to_ptr.vmem [resolvable:$true] %s92
      %s94 = sshll.u32 %s1, 4
      %s95 = int_to_ptr.hbm [resolvable:$true] %s94
      %97 = dma.vmem_to_hbm [thread:$0]  %s93, 256, %s95, [#allocation4]
    $region13: #{tpu_custom_call.1} parent=1 // pred_fallthru
      _
    // Predicated region
    $region14: #{tpu_custom_call.1} parent=1 // pred_check
      _
    $region15: #{tpu_custom_call.1} parent=1 // pred_check_branch
      %99 = sbr.rel (0) target = $region17
    $region16: #{tpu_custom_call.1} parent=1 // pred_region
      %101 = dma.done [#allocation4], 256
    $region17: #{tpu_custom_call.1} parent=1 // pred_fallthru
      _
    %102 = vsyncpa [#allocation3], 1
    %103 = vsyncpa [#allocation4], 1

</llo_original>
